<compile_context>
chip_gen: v7x
topology: tpu7x:2x2x1
jax: 0.10.0
libtpu: 0.0.40
codegen_flags: <defaults>
</compile_context>

<pallas_src>
import functools
import math

import jax
import jax.numpy as jnp
from jax.experimental import pallas as pl
from jax.experimental.pallas import tpu as pltpu

LN_EPS = 1e-5  # torch.nn.LayerNorm default


# ---------------------------------------------------------------------------
# Kernel
# ---------------------------------------------------------------------------
def _patch_split_kernel(x_ref, w_ref, gb_ref, o_ref, *scratch, bf16_tail):
    # x_ref : (M, C)          M = TH*W flattened input pixels (row = bh*W + w)
    # w_ref : (C4, C2)        Linear weight, (in, out)
    # gb_ref: (2, C2) f32     row 0 = LayerNorm gamma, row 1 = beta
    # o_ref : (TH, 2, W, C)   final layout: (bh, p, w, q*C2 + c), C = 2*C2
    # scratch: one VMEM (2, M, C) staging buffer iff W % 8 != 0
    th, _, W, C = o_ref.shape
    C4, C2 = C // 4, C // 2

    x = x_ref[...]                       # native dtype straight into the MXU
    w = w_ref[...]
    out_dt = o_ref.dtype
    tail_dt = out_dt if bf16_tail else jnp.float32
    gamma = gb_ref[0:1, :].astype(tail_dt)
    beta = gb_ref[1:2, :].astype(tail_dt)
    inv_c2 = 1.0 / C2

    def _proj_ln(xk):
        # (M, C4) @ (C4, C2) on the MXU with f32 accumulation, then LayerNorm
        # over the C2 axis (mean/var/rsqrt kept in f32 for accuracy).
        y = jnp.dot(xk, w, preferred_element_type=jnp.float32)
        mean = jnp.sum(y, axis=-1, keepdims=True) * inv_c2
        cen = y - mean
        var = jnp.sum(cen * cen, axis=-1, keepdims=True) * inv_c2
        yn = (cen * jax.lax.rsqrt(var + LN_EPS)).astype(tail_dt)
        return (yn * gamma + beta).astype(out_dt)

    # Input channel chunk k = 2*q + p feeds output pixel (2h+p, 2w+q).
    y00 = _proj_ln(x[:, 0 * C4:1 * C4])          # (p=0, q=0)
    y10 = _proj_ln(x[:, 1 * C4:2 * C4])          # (p=1, q=0)
    y01 = _proj_ln(x[:, 2 * C4:3 * C4])          # (p=0, q=1)
    y11 = _proj_ln(x[:, 3 * C4:4 * C4])          # (p=1, q=1)

    # Full-lane-width (..., 2*C2 = C) slabs -> unmasked, lane-dense stores.
    row_p0 = jnp.concatenate([y00, y01], axis=-1)        # (M, C)
    row_p1 = jnp.concatenate([y10, y11], axis=-1)        # (M, C)

    if W % 8 == 0:
        # (M, C) -> (TH, W, C) is a pure retiling when W is sublane-aligned.
        o_ref[:, 0, :, :] = row_p0.reshape(th, W, C)
        o_ref[:, 1, :, :] = row_p1.reshape(th, W, C)
    else:
        # Sublane-unaligned W: stage the slabs in VMEM, then de-interleave with
        # dynamic ref slices (one extra VMEM round-trip; HBM traffic unchanged).
        stg = scratch[0]
        stg[0, :, :] = row_p0
        stg[1, :, :] = row_p1

        def _store(h, carry):
            o_ref[h, 0, :, :] = stg[0, pl.ds(h * W, W), :]
            o_ref[h, 1, :, :] = stg[1, pl.ds(h * W, W), :]
            return carry

        jax.lax.fori_loop(0, th, _store, 0)


# ---------------------------------------------------------------------------
# Tiling / hardware helpers
# ---------------------------------------------------------------------------
def _hw_params():
    """(vmem_capacity_bytes, num_tensorcores, is_v5e) with safe fallbacks."""
    kind = ""
    try:
        kind = jax.devices()[0].device_kind.lower()
    except Exception:
        pass
    is_v5e = ("v5e" in kind) or ("v5 lite" in kind) or ("v5lite" in kind)
    is_v7 = ("v7" in kind) or ("7x" in kind)
    # Dual-TensorCore ("megacore") chips: v4, v5p, v7x.  v5e/v6e are 1 TC.
    dual_tc = is_v7 or ("v4" in kind) or ("v5p" in kind) or \
              ("v5" in kind and not is_v5e)
    try:
        vmem_cap = int(pltpu.get_tpu_info().vmem_capacity_bytes)
    except Exception:
        vmem_cap = (64 if is_v7 else 128) * 1024 * 1024
    return vmem_cap, (2 if dual_tc else 1), is_v5e


def _pick_rows_per_step(BH, W, C, itemsize, vmem_cap, num_cores):
    """Rows of h per grid step.

    Sized so double-buffered in/out blocks + f32 LayerNorm intermediates (+ the
    optional staging buffer) fit ~60% of this generation's VMEM, with the
    whole-block matmul M = TH*W around a few thousand rows.  On dual-TC chips
    keep >= 2 grid steps per core; on single-TC chips just take the biggest
    tile (fewer ~0.35 us per-step overheads for this mem-bound kernel).
    """
    # Per h-row footprint: 2x (double-buffer) * (W*C in + 2*W*C out) + ~4*W*C
    # f32 intermediates + 2*W*C staging.
    per_row = W * C * (2 * 3 * itemsize + 4 * 4 + 2 * itemsize)
    budget = max(1 << 20, int(vmem_cap * 0.6))
    rows_cap = max(1, budget // per_row)
    rows_target = max(1, 4096 // max(W, 1))          # M = TH*W ~<= 4K rows
    max_th = max(1, min(BH, rows_cap, rows_target))
    if num_cores > 1 and BH >= 2 * num_cores:
        max_th = min(max_th, max(1, BH // (2 * num_cores)))
    if max_th >= BH:
        return BH                                     # single full block
    # Flat input block is (TH*W, C): keep TH*W a multiple of 8 sublanes.
    align = 8 // math.gcd(W, 8)
    best = 0
    for d in range(max_th, 0, -1):                    # prefer a divisor of BH
        if BH % d == 0 and d % align == 0:
            best = d
            break
    if best and 2 * best >= max_th:
        return best
    th = (max_th // align) * align                    # cdiv grid, padded tail
    return th if th > 0 else min(BH, align)


# ---------------------------------------------------------------------------
# Wrapper
# ---------------------------------------------------------------------------
@functools.partial(jax.jit, static_argnums=(4, 5))
def patch_split(x, w, gamma, beta, H, W):
    """x: (B, H*W, C) -> (B, 4*H*W, C//2).  Matches PatchSplit.forward."""
    B, L, C = x.shape
    assert L == H * W and C % 4 == 0
    C4, C2 = C // 4, C // 2
    BH = B * H

    vmem_cap, num_cores, is_v5e = _hw_params()
    itemsize = jnp.dtype(x.dtype).itemsize
    th = _pick_rows_per_step(BH, W, C, itemsize, vmem_cap, num_cores)
    R = th * W
    grid = (pl.cdiv(BH, th),)

    x2 = x.reshape(BH * W, C)                            # free contiguous view
    w = w.astype(x.dtype)                                # native MXU operand pair
    gb = jnp.stack([gamma, beta]).astype(jnp.float32)    # (2, C2)

    # bf16 VALU exists on v6e/v7x -> do the LN affine tail + output cast in
    # bf16 there; v5e has no bf16 VPU, keep the tail in f32.
    bf16_tail = (x.dtype == jnp.bfloat16) and (not is_v5e)

    staged = (W % 8 != 0)
    scratch = [pltpu.VMEM((2, R, C), x.dtype)] if staged else []

    out4 = pl.pallas_call(
        functools.partial(_patch_split_kernel, bf16_tail=bf16_tail),
        out_shape=jax.ShapeDtypeStruct((BH, 2, W, C), x.dtype),
        grid_spec=pltpu.PrefetchScalarGridSpec(
            num_scalar_prefetch=0,
            grid=grid,
            in_specs=[
                pl.BlockSpec((R, C), lambda i: (i, 0)),
                pl.BlockSpec((C4, C2), lambda i: (0, 0)),
                pl.BlockSpec((2, C2), lambda i: (0, 0)),
            ],
            out_specs=pl.BlockSpec((th, 2, W, C), lambda i: (i, 0, 0, 0)),
            scratch_shapes=scratch,
        ),
        compiler_params=pltpu.CompilerParams(
            dimension_semantics=("parallel",),
            vmem_limit_bytes=int(min(vmem_cap * 3 // 4, 100 * 1024 * 1024)),
        ),
    )(x2, w, gb)

    # (BH, 2, W, C) has exactly the (B, 4*H*W, C2) memory layout.
    return out4.reshape(B, 4 * L, C2)


# ---------------------------------------------------------------------------
# Pure-JAX reference (mirrors the PyTorch forward) for correctness checking.
# ---------------------------------------------------------------------------
def _pixel_shuffle_reorder(x, H, W):
    B, L, C = x.shape
    assert L == H * W and C % 4 == 0
    C4 = C // 4
    x = x.reshape(B, H, W, 4, C4)
    x = x[:, :, :, jnp.array([0, 2, 1, 3]), :]
    x = x.reshape(B, H, W, 2, 2, C4)
    x = jnp.transpose(x, (0, 1, 3, 2, 4, 5))             # (B, H, 2, W, 2, C4)
    x = x.reshape(B, H * 2 * W * 2, C4)
    return x


def _reference(x, w, gamma, beta, H, W):
    xs = _pixel_shuffle_reorder(x, H, W)
    y = xs @ w
    mean = jnp.mean(y, axis=-1, keepdims=True)
    var = jnp.mean((y - mean) ** 2, axis=-1, keepdims=True)
    yn = (y - mean) / jnp.sqrt(var + LN_EPS)
    return yn * gamma + beta


if __name__ == "__main__":
    def run_case(B, H, W, C, dtype, atol, rtol, seed=0):
        C4, C2 = C // 4, C // 2
        key = jax.random.PRNGKey(seed)
        kx, kw = jax.random.split(key)
        x = jax.random.normal(kx, (B, H * W, C), dtype=jnp.float32).astype(dtype)
        w = (jax.random.normal(kw, (C4, C2), dtype=jnp.float32)
             * (1.0 / jnp.sqrt(C4))).astype(dtype)        # Linear weight (in, out)
        gamma = jnp.ones((C2,), dtype=jnp.float32)        # LayerNorm weight
        beta = jnp.zeros((C2,), dtype=jnp.float32)        # LayerNorm bias

        out = jax.block_until_ready(patch_split(x, w, gamma, beta, H, W))
        ref = _reference(x.astype(jnp.float32), w.astype(jnp.float32),
                         gamma, beta, H, W)
        assert out.shape == (B, 4 * H * W, C2), out.shape
        assert jnp.allclose(out.astype(jnp.float32), ref, atol=atol, rtol=rtol), \
            f"mismatch vs reference for case {(B, H, W, C, dtype)}"

    # Module config: dim = C = 32 -> Linear(8 -> 16, bias=False), LayerNorm(16)
    # Sublane-aligned W (single retiling + two big slab stores).
    run_case(B=2, H=4, W=8, C=32, dtype=jnp.float32, atol=1e-4, rtol=1e-4)
    # Unaligned W (VMEM staging + de-interleave store path).
    run_case(B=2, H=4, W=4, C=32, dtype=jnp.float32, atol=1e-4, rtol=1e-4)
    # bf16 activations/weights (bf16-in / f32-accumulate matmul, f32 LN stats).
    run_case(B=2, H=4, W=8, C=32, dtype=jnp.bfloat16, atol=3e-2, rtol=3e-2)
    print("KERNEL_OK")
</pallas_src>

<mosaic_0001>
module attributes {stable_mosaic.version = 11 : i64} {
  func.func @_patch_split_kernel(%arg0: i32, %arg1: memref<64x32xf32, #tpu.memory_space<vmem>>, %arg2: memref<8x16xf32, #tpu.memory_space<vmem>>, %arg3: memref<2x16xf32, #tpu.memory_space<vmem>>, %arg4: memref<8x2x8x32xf32, #tpu.memory_space<vmem>>) attributes {dimension_semantics = [#tpu.dimension_semantics<parallel>], iteration_bounds = array<i64: 1>, scalar_prefetch = 0 : i64, scratch_operands = 0 : i64, tpu.core_type = #tpu.core_type<tc>, window_params = [{transform_indices = @transform_0, window_bounds = array<i64: 64, 32>}, {pipeline_mode = #tpu.pipeline_mode<synchronous>, transform_indices = @transform_1, window_bounds = array<i64: 8, 16>}, {pipeline_mode = #tpu.pipeline_mode<synchronous>, transform_indices = @transform_2, window_bounds = array<i64: 2, 16>}, {transform_indices = @transform_3, window_bounds = array<i64: 8, 2, 8, 32>}]} {
    %c0 = arith.constant 0 : index
    %c0_0 = arith.constant 0 : index
    %0 = vector.load %arg1[%c0, %c0_0] : memref<64x32xf32, #tpu.memory_space<vmem>>, vector<64x32xf32>
    %c0_1 = arith.constant 0 : index
    %c0_2 = arith.constant 0 : index
    %1 = vector.load %arg2[%c0_1, %c0_2] : memref<8x16xf32, #tpu.memory_space<vmem>>, vector<8x16xf32>
    %c0_3 = arith.constant 0 : index
    %c0_4 = arith.constant 0 : index
    %2 = vector.load %arg3[%c0_3, %c0_4] : memref<2x16xf32, #tpu.memory_space<vmem>>, vector<1x16xf32>
    %c1 = arith.constant 1 : index
    %c0_5 = arith.constant 0 : index
    %3 = vector.load %arg3[%c1, %c0_5] : memref<2x16xf32, #tpu.memory_space<vmem>>, vector<1x16xf32>
    %4 = vector.extract_strided_slice %0 {offsets = [0, 0], sizes = [64, 8], strides = [1, 1]} : vector<64x32xf32> to vector<64x8xf32>
    %cst = arith.constant dense<0.000000e+00> : vector<64x16xf32>
    %5 = tpu.matmul %4, %1, %cst {dimension_numbers = #tpu.dot_dimension_numbers<[1], [0], [0], [1], [0, 0, 1, 1], [], []>} : vector<64x8xf32>, vector<8x16xf32>, vector<64x16xf32> -> vector<64x16xf32>
    %cst_6 = arith.constant dense<0.000000e+00> : vector<64xf32>
    %6 = vector.multi_reduction <add>, %5, %cst_6 [1] : vector<64x16xf32> to vector<64xf32>
    %7 = vector.shape_cast %6 : vector<64xf32> to vector<64x1xf32>
    %cst_7 = arith.constant 6.250000e-02 : f32
    %8 = vector.broadcast %cst_7 : f32 to vector<64x1xf32>
    %9 = arith.mulf %7, %8 : vector<64x1xf32>
    %10 = vector.broadcast %9 : vector<64x1xf32> to vector<64x16xf32>
    %11 = arith.subf %5, %10 : vector<64x16xf32>
    %12 = arith.mulf %11, %11 : vector<64x16xf32>
    %cst_8 = arith.constant dense<0.000000e+00> : vector<64xf32>
    %13 = vector.multi_reduction <add>, %12, %cst_8 [1] : vector<64x16xf32> to vector<64xf32>
    %14 = vector.shape_cast %13 : vector<64xf32> to vector<64x1xf32>
    %cst_9 = arith.constant 6.250000e-02 : f32
    %15 = vector.broadcast %cst_9 : f32 to vector<64x1xf32>
    %16 = arith.mulf %14, %15 : vector<64x1xf32>
    %cst_10 = arith.constant 9.99999974E-6 : f32
    %17 = vector.broadcast %cst_10 : f32 to vector<64x1xf32>
    %18 = arith.addf %16, %17 : vector<64x1xf32>
    %19 = math.rsqrt %18 : vector<64x1xf32>
    %20 = vector.broadcast %19 : vector<64x1xf32> to vector<64x16xf32>
    %21 = arith.mulf %11, %20 : vector<64x16xf32>
    %22 = vector.broadcast %2 : vector<1x16xf32> to vector<64x16xf32>
    %23 = arith.mulf %21, %22 : vector<64x16xf32>
    %24 = vector.broadcast %3 : vector<1x16xf32> to vector<64x16xf32>
    %25 = arith.addf %23, %24 : vector<64x16xf32>
    %26 = vector.extract_strided_slice %0 {offsets = [0, 8], sizes = [64, 8], strides = [1, 1]} : vector<64x32xf32> to vector<64x8xf32>
    %cst_11 = arith.constant dense<0.000000e+00> : vector<64x16xf32>
    %27 = tpu.matmul %26, %1, %cst_11 {dimension_numbers = #tpu.dot_dimension_numbers<[1], [0], [0], [1], [0, 0, 1, 1], [], []>} : vector<64x8xf32>, vector<8x16xf32>, vector<64x16xf32> -> vector<64x16xf32>
    %cst_12 = arith.constant dense<0.000000e+00> : vector<64xf32>
    %28 = vector.multi_reduction <add>, %27, %cst_12 [1] : vector<64x16xf32> to vector<64xf32>
    %29 = vector.shape_cast %28 : vector<64xf32> to vector<64x1xf32>
    %cst_13 = arith.constant 6.250000e-02 : f32
    %30 = vector.broadcast %cst_13 : f32 to vector<64x1xf32>
    %31 = arith.mulf %29, %30 : vector<64x1xf32>
    %32 = vector.broadcast %31 : vector<64x1xf32> to vector<64x16xf32>
    %33 = arith.subf %27, %32 : vector<64x16xf32>
    %34 = arith.mulf %33, %33 : vector<64x16xf32>
    %cst_14 = arith.constant dense<0.000000e+00> : vector<64xf32>
    %35 = vector.multi_reduction <add>, %34, %cst_14 [1] : vector<64x16xf32> to vector<64xf32>
    %36 = vector.shape_cast %35 : vector<64xf32> to vector<64x1xf32>
    %cst_15 = arith.constant 6.250000e-02 : f32
    %37 = vector.broadcast %cst_15 : f32 to vector<64x1xf32>
    %38 = arith.mulf %36, %37 : vector<64x1xf32>
    %cst_16 = arith.constant 9.99999974E-6 : f32
    %39 = vector.broadcast %cst_16 : f32 to vector<64x1xf32>
    %40 = arith.addf %38, %39 : vector<64x1xf32>
    %41 = math.rsqrt %40 : vector<64x1xf32>
    %42 = vector.broadcast %41 : vector<64x1xf32> to vector<64x16xf32>
    %43 = arith.mulf %33, %42 : vector<64x16xf32>
    %44 = vector.broadcast %2 : vector<1x16xf32> to vector<64x16xf32>
    %45 = arith.mulf %43, %44 : vector<64x16xf32>
    %46 = vector.broadcast %3 : vector<1x16xf32> to vector<64x16xf32>
    %47 = arith.addf %45, %46 : vector<64x16xf32>
    %48 = vector.extract_strided_slice %0 {offsets = [0, 16], sizes = [64, 8], strides = [1, 1]} : vector<64x32xf32> to vector<64x8xf32>
    %cst_17 = arith.constant dense<0.000000e+00> : vector<64x16xf32>
    %49 = tpu.matmul %48, %1, %cst_17 {dimension_numbers = #tpu.dot_dimension_numbers<[1], [0], [0], [1], [0, 0, 1, 1], [], []>} : vector<64x8xf32>, vector<8x16xf32>, vector<64x16xf32> -> vector<64x16xf32>
    %cst_18 = arith.constant dense<0.000000e+00> : vector<64xf32>
    %50 = vector.multi_reduction <add>, %49, %cst_18 [1] : vector<64x16xf32> to vector<64xf32>
    %51 = vector.shape_cast %50 : vector<64xf32> to vector<64x1xf32>
    %cst_19 = arith.constant 6.250000e-02 : f32
    %52 = vector.broadcast %cst_19 : f32 to vector<64x1xf32>
    %53 = arith.mulf %51, %52 : vector<64x1xf32>
    %54 = vector.broadcast %53 : vector<64x1xf32> to vector<64x16xf32>
    %55 = arith.subf %49, %54 : vector<64x16xf32>
    %56 = arith.mulf %55, %55 : vector<64x16xf32>
    %cst_20 = arith.constant dense<0.000000e+00> : vector<64xf32>
    %57 = vector.multi_reduction <add>, %56, %cst_20 [1] : vector<64x16xf32> to vector<64xf32>
    %58 = vector.shape_cast %57 : vector<64xf32> to vector<64x1xf32>
    %cst_21 = arith.constant 6.250000e-02 : f32
    %59 = vector.broadcast %cst_21 : f32 to vector<64x1xf32>
    %60 = arith.mulf %58, %59 : vector<64x1xf32>
    %cst_22 = arith.constant 9.99999974E-6 : f32
    %61 = vector.broadcast %cst_22 : f32 to vector<64x1xf32>
    %62 = arith.addf %60, %61 : vector<64x1xf32>
    %63 = math.rsqrt %62 : vector<64x1xf32>
    %64 = vector.broadcast %63 : vector<64x1xf32> to vector<64x16xf32>
    %65 = arith.mulf %55, %64 : vector<64x16xf32>
    %66 = vector.broadcast %2 : vector<1x16xf32> to vector<64x16xf32>
    %67 = arith.mulf %65, %66 : vector<64x16xf32>
    %68 = vector.broadcast %3 : vector<1x16xf32> to vector<64x16xf32>
    %69 = arith.addf %67, %68 : vector<64x16xf32>
    %70 = vector.extract_strided_slice %0 {offsets = [0, 24], sizes = [64, 8], strides = [1, 1]} : vector<64x32xf32> to vector<64x8xf32>
    %cst_23 = arith.constant dense<0.000000e+00> : vector<64x16xf32>
    %71 = tpu.matmul %70, %1, %cst_23 {dimension_numbers = #tpu.dot_dimension_numbers<[1], [0], [0], [1], [0, 0, 1, 1], [], []>} : vector<64x8xf32>, vector<8x16xf32>, vector<64x16xf32> -> vector<64x16xf32>
    %cst_24 = arith.constant dense<0.000000e+00> : vector<64xf32>
    %72 = vector.multi_reduction <add>, %71, %cst_24 [1] : vector<64x16xf32> to vector<64xf32>
    %73 = vector.shape_cast %72 : vector<64xf32> to vector<64x1xf32>
    %cst_25 = arith.constant 6.250000e-02 : f32
    %74 = vector.broadcast %cst_25 : f32 to vector<64x1xf32>
    %75 = arith.mulf %73, %74 : vector<64x1xf32>
    %76 = vector.broadcast %75 : vector<64x1xf32> to vector<64x16xf32>
    %77 = arith.subf %71, %76 : vector<64x16xf32>
    %78 = arith.mulf %77, %77 : vector<64x16xf32>
    %cst_26 = arith.constant dense<0.000000e+00> : vector<64xf32>
    %79 = vector.multi_reduction <add>, %78, %cst_26 [1] : vector<64x16xf32> to vector<64xf32>
    %80 = vector.shape_cast %79 : vector<64xf32> to vector<64x1xf32>
    %cst_27 = arith.constant 6.250000e-02 : f32
    %81 = vector.broadcast %cst_27 : f32 to vector<64x1xf32>
    %82 = arith.mulf %80, %81 : vector<64x1xf32>
    %cst_28 = arith.constant 9.99999974E-6 : f32
    %83 = vector.broadcast %cst_28 : f32 to vector<64x1xf32>
    %84 = arith.addf %82, %83 : vector<64x1xf32>
    %85 = math.rsqrt %84 : vector<64x1xf32>
    %86 = vector.broadcast %85 : vector<64x1xf32> to vector<64x16xf32>
    %87 = arith.mulf %77, %86 : vector<64x16xf32>
    %88 = vector.broadcast %2 : vector<1x16xf32> to vector<64x16xf32>
    %89 = arith.mulf %87, %88 : vector<64x16xf32>
    %90 = vector.broadcast %3 : vector<1x16xf32> to vector<64x16xf32>
    %91 = arith.addf %89, %90 : vector<64x16xf32>
    %92 = tpu.concatenate %25, %69 in 1 : vector<64x16xf32>, vector<64x16xf32> -> vector<64x32xf32>
    %93 = tpu.concatenate %47, %91 in 1 : vector<64x16xf32>, vector<64x16xf32> -> vector<64x32xf32>
    %94 = vector.shape_cast %92 : vector<64x32xf32> to vector<8x8x32xf32>
    %c0_29 = arith.constant 0 : index
    %c0_30 = arith.constant 0 : index
    %c0_31 = arith.constant 0 : index
    %c0_32 = arith.constant 0 : index
    %95 = vector.load %arg4[%c0_29, %c0_30, %c0_31, %c0_32] : memref<8x2x8x32xf32, #tpu.memory_space<vmem>>, vector<8x1x8x32xf32>
    %96 = vector.shape_cast %95 : vector<8x1x8x32xf32> to vector<8x8x32xf32>
    %97 = vector.shape_cast %94 : vector<8x8x32xf32> to vector<8x1x8x32xf32>
    tpu.vector_store %arg4[%c0_29, %c0_30, %c0_31, %c0_32], %97 {strides = array<i32>} : memref<8x2x8x32xf32, #tpu.memory_space<vmem>>, vector<8x1x8x32xf32>,
    %98 = vector.shape_cast %93 : vector<64x32xf32> to vector<8x8x32xf32>
    %c0_33 = arith.constant 0 : index
    %c1_34 = arith.constant 1 : index
    %c0_35 = arith.constant 0 : index
    %c0_36 = arith.constant 0 : index
    %99 = vector.load %arg4[%c0_33, %c1_34, %c0_35, %c0_36] : memref<8x2x8x32xf32, #tpu.memory_space<vmem>>, vector<8x1x8x32xf32>
    %100 = vector.shape_cast %99 : vector<8x1x8x32xf32> to vector<8x8x32xf32>
    %101 = vector.shape_cast %98 : vector<8x8x32xf32> to vector<8x1x8x32xf32>
    tpu.vector_store %arg4[%c0_33, %c1_34, %c0_35, %c0_36], %101 {strides = array<i32>} : memref<8x2x8x32xf32, #tpu.memory_space<vmem>>, vector<8x1x8x32xf32>,
    return
  }
  func.func @transform_0(%arg0: i32) -> (i32, i32) {
    %c0_i32 = arith.constant 0 : i32
    %c0_i32_0 = arith.constant 0 : i32
    return %arg0, %c0_i32 : i32, i32
  }
  func.func @transform_1(%arg0: i32) -> (i32, i32) {
    %c0_i32 = arith.constant 0 : i32
    %c0_i32_0 = arith.constant 0 : i32
    %c0_i32_1 = arith.constant 0 : i32
    return %c0_i32, %c0_i32_0 : i32, i32
  }
  func.func @transform_2(%arg0: i32) -> (i32, i32) {
    %c0_i32 = arith.constant 0 : i32
    %c0_i32_0 = arith.constant 0 : i32
    %c0_i32_1 = arith.constant 0 : i32
    return %c0_i32, %c0_i32_0 : i32, i32
  }
  func.func @transform_3(%arg0: i32) -> (i32, i32, i32, i32) {
    %c0_i32 = arith.constant 0 : i32
    %c0_i32_0 = arith.constant 0 : i32
    %c0_i32_1 = arith.constant 0 : i32
    %c0_i32_2 = arith.constant 0 : i32
    return %arg0, %c0_i32, %c0_i32_0, %c0_i32_1 : i32, i32, i32, i32
  }
}

</mosaic_0001>

<llo_original>
// kernel: patch_split.1
$region0: #{patch_split.1}
  #allocation0 [shape = 'u32[]', space=smem, size = 0x4, offset = 0x4, fixed_abs, tag = 'smem constant byte address 0x4 - core index']
  #allocation1 [shape = 'u32[144,128]{1,0:T(1,128)}', space=vmem, size = 0x12000, scoped, tag = 'internal scratch']
  %s0 = inlined_call_operand.hbm [shape: f32[64,32], index: 0, kind: input, shape index: {}]
  %s1 = inlined_call_operand.hbm [shape: f32[8,16], index: 1, kind: input, shape index: {}]
  %s2 = inlined_call_operand.hbm [shape: f32[2,16], index: 2, kind: input, shape index: {}]
  %s3 = inlined_call_operand.hbm [shape: f32[8,2,8,32], index: 3, kind: output, shape index: {}]
  %s4 = sld [smem:[#allocation0]]
  $region34: #{patch_split.1} parent=0
    _
  %s6 = ssub.s32 1, %s4
  %s7 = scalar_select 0, %s6, %s4
  $region1: #{patch_split.1} parent=0
    #allocation2 [shape = 'u8[32768]{0}', space=vmem, size = 0x8000, scoped, tag = 'input window, operand 0, single buffered']
    #allocation3 [shape = 's32[1]{0}', space=sflag, size = 0x4, scoped, tag = 'scoped memory for patch_split.1']
    #allocation4 [shape = 's32[1]{0}', space=sflag, size = 0x4, scoped, tag = 'scoped memory for patch_split.1']
    #allocation5 [shape = 'u8[4096]{0}', space=vmem, size = 0x1000, scoped, tag = 'input window, operand 1, single buffered']
    #allocation6 [shape = 's32[1]{0}', space=sflag, size = 0x4, scoped, tag = 'scoped memory for patch_split.1']
    #allocation7 [shape = 'u8[1024]{0}', space=vmem, size = 0x400, scoped, tag = 'input window, operand 2, single buffered']
    #allocation8 [shape = 'u8[65536]{0}', space=vmem, size = 0x10000, scoped, tag = 'output window, operand 0, single buffered']
    %8 = vsyncpa [#allocation3], 0
    %9 = vsyncpa [#allocation6], 0
    %10 = vsyncpa [#allocation4], 0
    // Predicated region
    $region2: #{patch_split.1} parent=1 // pred_check
      _
    $region3: #{patch_split.1} parent=1 // pred_check_branch
      %12 = sbr.rel (0) target = $region5
    $region4: #{patch_split.1} parent=1 // pred_region
      %s14 = ssub.s32 1024, 1024
      %15 = vsyncadd [#allocation3], %s14
      %s16 = sshll.u32 [#allocation2], 4
      %s17 = int_to_ptr.vmem [resolvable:$true] %s16
      %22 = dma.hbm_to_vmem [thread:$0]  %s0, 1024, %s17, [#allocation3], 128, 128, 8
    $region5: #{patch_split.1} parent=1 // pred_fallthru
      _
    // Predicated region
    $region6: #{patch_split.1} parent=1 // pred_check
      _
    $region7: #{patch_split.1} parent=1 // pred_check_branch
      %24 = sbr.rel (0) target = $region9
    $region8: #{patch_split.1} parent=1 // pred_region
      %s26 = ssub.s32 128, 128
      %27 = vsyncadd [#allocation6], %s26
      %s29 = sshll.u32 [#allocation5], 4
      %s30 = int_to_ptr.vmem [resolvable:$true] %s29
      %32 = dma.hbm_to_vmem [thread:$0]  %s1, 128, %s30, [#allocation6]
    $region9: #{patch_split.1} parent=1 // pred_fallthru
      _
    // Predicated region
    $region10: #{patch_split.1} parent=1 // pred_check
      _
    $region11: #{patch_split.1} parent=1 // pred_check_branch
      %34 = sbr.rel (0) target = $region13
    $region12: #{patch_split.1} parent=1 // pred_region
      %s36 = ssub.s32 32, 32
      %37 = vsyncadd [#allocation6], %s36
      %s39 = sshll.u32 [#allocation7], 4
      %s40 = int_to_ptr.vmem [resolvable:$true] %s39
      %42 = dma.hbm_to_vmem [thread:$0]  %s2, 32, %s40, [#allocation6]
    $region13: #{patch_split.1} parent=1 // pred_fallthru
      _
    // Predicated region
    $region14: #{patch_split.1} parent=1 // pred_check
      _
    $region15: #{patch_split.1} parent=1 // pred_check_branch
      %44 = sbr.rel (0) target = $region17
    $region16: #{patch_split.1} parent=1 // pred_region
      %45 = dma.done [#allocation3], 1024
    $region17: #{patch_split.1} parent=1 // pred_fallthru
      _
    // Predicated region
    $region18: #{patch_split.1} parent=1 // pred_check
      _
    $region19: #{patch_split.1} parent=1 // pred_check_branch
      %47 = sbr.rel (0) target = $region21
    $region20: #{patch_split.1} parent=1 // pred_region
      %48 = dma.done [#allocation6], 128
    $region21: #{patch_split.1} parent=1 // pred_fallthru
      _
    // Predicated region
    $region22: #{patch_split.1} parent=1 // pred_check
      _
    $region23: #{patch_split.1} parent=1 // pred_check_branch
      %50 = sbr.rel (0) target = $region25
    $region24: #{patch_split.1} parent=1 // pred_region
      %51 = dma.done [#allocation6], 32
    $region25: #{patch_split.1} parent=1 // pred_fallthru
      _
    %v52 = vld [vmem:[#allocation2] sm:$0xff]
    %v53 = vld [vmem:[#allocation2 + $0x8] sm:$0xff]
    %v54 = vld [vmem:[#allocation2 + $0x10] sm:$0xff]
    %v55 = vld [vmem:[#allocation2 + $0x18] sm:$0xff]
    %v56 = vld [vmem:[#allocation2 + $0x20] sm:$0xff]
    %v57 = vld [vmem:[#allocation2 + $0x28] sm:$0xff]
    %v58 = vld [vmem:[#allocation2 + $0x30] sm:$0xff]
    %v59 = vld [vmem:[#allocation2 + $0x38] sm:$0xff]
    %v60 = vld [vmem:[#allocation5] sm:$0xff]
    %v61 = vld [vmem:[#allocation7] sm:$0x1]
    %v62 = vld [vmem:[#allocation7 + $0x1] sm:$0x1]
    %vm63 = vcmask 64512
    %v65 = vsel %vm63, %v52, 0
    %v68 = vsel %vm63, %v53, 0
    %v71 = vsel %vm63, %v54, 0
    %v74 = vsel %vm63, %v55, 0
    %v77 = vsel %vm63, %v56, 0
    %v80 = vsel %vm63, %v57, 0
    %v83 = vsel %vm63, %v58, 0
    %v86 = vsel %vm63, %v59, 0
    %88 = vmatprep.subr.mxu0 0.0
    %89 = vmatpush1.msra.mxu0 %v60
    %90 = vmatprep.subr.mxu0 0.0
    %91 = vmatpush1.msra.mxu0 0.0
    %92 = vmatprep.subr.mxu0 0.0
    %93 = vmatpush1.msra.mxu0 0.0
    %94 = vmatprep.subr.mxu0 0.0
    %95 = vmatpush1.msra.mxu0 0.0
    %96 = vmatprep.subr.mxu0 0.0
    %97 = vmatpush1.msra.mxu0 0.0
    %98 = vmatprep.subr.mxu0 0.0
    %99 = vmatpush1.msra.mxu0 0.0
    %100 = vmatprep.subr.mxu0 0.0
    %101 = vmatpush1.msra.mxu0 0.0
    %102 = vmatprep.subr.mxu0 0.0
    %103 = vmatpush1.msra.mxu0 0.0
    %104 = vmatprep.subr.mxu0 0.0
    %105 = vmatpush1.msra.mxu0 0.0
    %106 = vmatprep.subr.mxu0 0.0
    %107 = vmatpush1.msra.mxu0 0.0
    %108 = vmatprep.subr.mxu0 0.0
    %109 = vmatpush1.msra.mxu0 0.0
    %110 = vmatprep.subr.mxu0 0.0
    %111 = vmatpush1.msra.mxu0 0.0
    %112 = vmatprep.subr.mxu0 0.0
    %113 = vmatpush1.msra.mxu0 0.0
    %114 = vmatprep.subr.mxu0 0.0
    %115 = vmatpush1.msra.mxu0 0.0
    %116 = vmatprep.subr.mxu0 0.0
    %117 = vmatpush1.msra.mxu0 0.0
    %118 = vmatprep.subr.mxu0 0.0
    %119 = vmatpush1.msra.mxu0 0.0
    %120 = vmatprep.subr.mxu0 0.0
    %121 = vmatpush1.msra.mxu0 0.0
    %122 = vmatprep.subr.mxu0 0.0
    %123 = vmatpush1.msra.mxu0 0.0
    %124 = vmatprep.subr.mxu0 0.0
    %125 = vmatpush1.msra.mxu0 0.0
    %126 = vmatprep.subr.mxu0 0.0
    %127 = vmatpush1.msra.mxu0 0.0
    %128 = vmatprep.subr.mxu0 0.0
    %129 = vmatpush1.msra.mxu0 0.0
    %130 = vmatprep.subr.mxu0 0.0
    %131 = vmatpush1.msra.mxu0 0.0
    %132 = vmatprep.subr.mxu0 0.0
    %133 = vmatpush1.msra.mxu0 0.0
    %134 = vmatprep.subr.mxu0 0.0
    %135 = vmatpush1.msra.mxu0 0.0
    %136 = vmatprep.subr.mxu0 0.0
    %137 = vmatpush1.msra.mxu0 0.0
    %138 = vmatprep.subr.mxu0 0.0
    %139 = vmatpush1.msra.mxu0 0.0
    %140 = vmatprep.subr.mxu0 0.0
    %141 = vmatpush1.msra.mxu0 0.0
    %142 = vmatprep.subr.mxu0 0.0
    %143 = vmatpush1.msra.mxu0 0.0
    %144 = vmatprep.subr.mxu0 0.0
    %145 = vmatpush1.msra.mxu0 0.0
    %146 = vmatprep.subr.mxu0 0.0
    %147 = vmatpush1.msra.mxu0 0.0
    %148 = vmatprep.subr.mxu0 0.0
    %149 = vmatpush1.msra.mxu0 0.0
    %150 = vmatprep.subr.mxu0 0.0
    %151 = vmatpush1.msra.mxu0 0.0
    %152 = vmatprep.mubr.f32.mxu0 0.0
    %153 = vmatmul.mubr.f32.gmra.mrb[0].mxu0 %v65
    %v154 = vpop.f32.mrb[0].mxu0
    %v155 = vadd.f32 0.0, %v154
    %v156 = vpop.f32.mrb[0].mxu0
    %157 = vmatprep.mubr.f32.mxu0 0.0
    %158 = vmatmul.mubr.f32.gmra.mrb[0].mxu0 %v68
    %v159 = vpop.f32.mrb[0].mxu0
    %v160 = vadd.f32 0.0, %v159
    %v161 = vpop.f32.mrb[0].mxu0
    %162 = vmatprep.mubr.f32.mxu0 0.0
    %163 = vmatmul.mubr.f32.gmra.mrb[0].mxu0 %v71
    %v164 = vpop.f32.mrb[0].mxu0
    %v165 = vadd.f32 0.0, %v164
    %v166 = vpop.f32.mrb[0].mxu0
    %167 = vmatprep.mubr.f32.mxu0 0.0
    %168 = vmatmul.mubr.f32.gmra.mrb[0].mxu0 %v74
    %v169 = vpop.f32.mrb[0].mxu0
    %v170 = vadd.f32 0.0, %v169
    %v171 = vpop.f32.mrb[0].mxu0
    %172 = vmatprep.mubr.f32.mxu0 0.0
    %173 = vmatmul.mubr.f32.gmra.mrb[0].mxu0 %v77
    %v174 = vpop.f32.mrb[0].mxu0
    %v175 = vadd.f32 0.0, %v174
    %v176 = vpop.f32.mrb[0].mxu0
    %177 = vmatprep.mubr.f32.mxu0 0.0
    %178 = vmatmul.mubr.f32.gmra.mrb[0].mxu0 %v80
    %v179 = vpop.f32.mrb[0].mxu0
    %v180 = vadd.f32 0.0, %v179
    %v181 = vpop.f32.mrb[0].mxu0
    %182 = vmatprep.mubr.f32.mxu0 0.0
    %183 = vmatmul.mubr.f32.gmra.mrb[0].mxu0 %v83
    %v184 = vpop.f32.mrb[0].mxu0
    %v185 = vadd.f32 0.0, %v184
    %v186 = vpop.f32.mrb[0].mxu0
    %187 = vmatprep.mubr.f32.mxu0 0.0
    %188 = vmatmul.mubr.f32.gmra.mrb[0].mxu0 %v86
    %v189 = vpop.f32.mrb[0].mxu0
    %v190 = vadd.f32 0.0, %v189
    %v191 = vpop.f32.mrb[0].mxu0
    %192 = vdwg.mxu0
    %vm193 = vcmask 130048
    %v194 = vsel %vm193, %v155, 0.0
    %195 = vadd.xlane.f32.xlu0 %v194
    %v196 = vpop.xlane.xlu0 %195
    %v197 = vsel %vm193, %v160, 0.0
    %198 = vadd.xlane.f32.xlu0 %v197
    %v199 = vpop.xlane.xlu0 %198
    %v200 = vsel %vm193, %v165, 0.0
    %201 = vadd.xlane.f32.xlu0 %v200
    %v202 = vpop.xlane.xlu0 %201
    %v203 = vsel %vm193, %v170, 0.0
    %204 = vadd.xlane.f32.xlu0 %v203
    %v205 = vpop.xlane.xlu0 %204
    %v206 = vsel %vm193, %v175, 0.0
    %207 = vadd.xlane.f32.xlu0 %v206
    %v208 = vpop.xlane.xlu0 %207
    %v209 = vsel %vm193, %v180, 0.0
    %210 = vadd.xlane.f32.xlu0 %v209
    %v211 = vpop.xlane.xlu0 %210
    %v212 = vsel %vm193, %v185, 0.0
    %213 = vadd.xlane.f32.xlu0 %v212
    %v214 = vpop.xlane.xlu0 %213
    %v215 = vsel %vm193, %v190, 0.0
    %216 = vadd.xlane.f32.xlu0 %v215
    %v217 = vpop.xlane.xlu0 %216
    %v218 = vmul.f32 %v196, 0.0625
    %v219 = vmul.f32 %v199, 0.0625
    %v220 = vmul.f32 %v202, 0.0625
    %v221 = vmul.f32 %v205, 0.0625
    %v222 = vmul.f32 %v208, 0.0625
    %v223 = vmul.f32 %v211, 0.0625
    %v224 = vmul.f32 %v214, 0.0625
    %v225 = vmul.f32 %v217, 0.0625
    %v226 = vsub.f32 %v155, %v218
    %v227 = vsub.f32 %v160, %v219
    %v228 = vsub.f32 %v165, %v220
    %v229 = vsub.f32 %v170, %v221
    %v230 = vsub.f32 %v175, %v222
    %v231 = vsub.f32 %v180, %v223
    %v232 = vsub.f32 %v185, %v224
    %v233 = vsub.f32 %v190, %v225
    %v234 = vmul.f32 %v226, %v226
    %v235 = vmul.f32 %v227, %v227
    %v236 = vmul.f32 %v228, %v228
    %v237 = vmul.f32 %v229, %v229
    %v238 = vmul.f32 %v230, %v230
    %v239 = vmul.f32 %v231, %v231
    %v240 = vmul.f32 %v232, %v232
    %v241 = vmul.f32 %v233, %v233
    %v242 = vsel %vm193, %v234, 0.0
    %243 = vadd.xlane.f32.xlu0 %v242
    %v244 = vpop.xlane.xlu0 %243
    %v245 = vsel %vm193, %v235, 0.0
    %246 = vadd.xlane.f32.xlu0 %v245
    %v247 = vpop.xlane.xlu0 %246
    %v248 = vsel %vm193, %v236, 0.0
    %249 = vadd.xlane.f32.xlu0 %v248
    %v250 = vpop.xlane.xlu0 %249
    %v251 = vsel %vm193, %v237, 0.0
    %252 = vadd.xlane.f32.xlu0 %v251
    %v253 = vpop.xlane.xlu0 %252
    %v254 = vsel %vm193, %v238, 0.0
    %255 = vadd.xlane.f32.xlu0 %v254
    %v256 = vpop.xlane.xlu0 %255
    %v257 = vsel %vm193, %v239, 0.0
    %258 = vadd.xlane.f32.xlu0 %v257
    %v259 = vpop.xlane.xlu0 %258
    %v260 = vsel %vm193, %v240, 0.0
    %261 = vadd.xlane.f32.xlu0 %v260
    %v262 = vpop.xlane.xlu0 %261
    %v263 = vsel %vm193, %v241, 0.0
    %264 = vadd.xlane.f32.xlu0 %v263
    %v265 = vpop.xlane.xlu0 %264
    %v266 = vmul.f32 %v244, 0.0625
    %v267 = vmul.f32 %v247, 0.0625
    %v268 = vmul.f32 %v250, 0.0625
    %v269 = vmul.f32 %v253, 0.0625
    %v270 = vmul.f32 %v256, 0.0625
    %v271 = vmul.f32 %v259, 0.0625
    %v272 = vmul.f32 %v262, 0.0625
    %v273 = vmul.f32 %v265, 0.0625
    %v274 = vadd.f32 %v266, 1e-05
    %v275 = vadd.f32 %v267, 1e-05
    %v276 = vadd.f32 %v268, 1e-05
    %v277 = vadd.f32 %v269, 1e-05
    %v278 = vadd.f32 %v270, 1e-05
    %v279 = vadd.f32 %v271, 1e-05
    %v280 = vadd.f32 %v272, 1e-05
    %v281 = vadd.f32 %v273, 1e-05
    %v282 = vrsqrt.pop %v274
    %v283 = vrsqrt.pop %v275
    %v284 = vrsqrt.pop %v276
    %v285 = vrsqrt.pop %v277
    %v286 = vrsqrt.pop %v278
    %v287 = vrsqrt.pop %v279
    %v288 = vrsqrt.pop %v280
    %v289 = vrsqrt.pop %v281
    %v290 = vmul.f32 %v226, %v282
    %v291 = vmul.f32 %v227, %v283
    %v292 = vmul.f32 %v228, %v284
    %v293 = vmul.f32 %v229, %v285
    %v294 = vmul.f32 %v230, %v286
    %v295 = vmul.f32 %v231, %v287
    %v296 = vmul.f32 %v232, %v288
    %v297 = vmul.f32 %v233, %v289
    %v298 = vlaneseq
    %v299 = vshrl.u32 %v298, 7
    %v300 = vsub.s32 0, %v299
    %v301 = vrot.slane %v61, %v300
    %v302 = vmul.f32 %v290, %v301
    %v303 = vmul.f32 %v291, %v301
    %v304 = vmul.f32 %v292, %v301
    %v305 = vmul.f32 %v293, %v301
    %v306 = vmul.f32 %v294, %v301
    %v307 = vmul.f32 %v295, %v301
    %v308 = vmul.f32 %v296, %v301
    %v309 = vmul.f32 %v297, %v301
    %v310 = vlaneseq
    %v311 = vshrl.u32 %v310, 7
    %v312 = vsub.s32 0, %v311
    %v313 = vrot.slane %v62, %v312
    %v314 = vadd.f32 %v302, %v313
    %v315 = vadd.f32 %v303, %v313
    %v316 = vadd.f32 %v304, %v313
    %v317 = vadd.f32 %v305, %v313
    %v318 = vadd.f32 %v306, %v313
    %v319 = vadd.f32 %v307, %v313
    %v320 = vadd.f32 %v308, %v313
    %v321 = vadd.f32 %v309, %v313
    %322 = vrot.lane.b32.xlu0 %v52, 120
    %v323 = vpop.permute.xlu0 %322
    %324 = vrot.lane.b32.xlu0 %v53, 120
    %v325 = vpop.permute.xlu0 %324
    %326 = vrot.lane.b32.xlu0 %v54, 120
    %v327 = vpop.permute.xlu0 %326
    %328 = vrot.lane.b32.xlu0 %v55, 120
    %v329 = vpop.permute.xlu0 %328
    %330 = vrot.lane.b32.xlu0 %v56, 120
    %v331 = vpop.permute.xlu0 %330
    %332 = vrot.lane.b32.xlu0 %v57, 120
    %v333 = vpop.permute.xlu0 %332
    %334 = vrot.lane.b32.xlu0 %v58, 120
    %v335 = vpop.permute.xlu0 %334
    %336 = vrot.lane.b32.xlu0 %v59, 120
    %v337 = vpop.permute.xlu0 %336
    %v338 = vsel %vm63, %v323, 0
    %v340 = vsel %vm63, %v325, 0
    %v342 = vsel %vm63, %v327, 0
    %v344 = vsel %vm63, %v329, 0
    %v346 = vsel %vm63, %v331, 0
    %v348 = vsel %vm63, %v333, 0
    %v350 = vsel %vm63, %v335, 0
    %v352 = vsel %vm63, %v337, 0
    %354 = vmatprep.subr.mxu0 0.0
    %355 = vmatpush1.msra.mxu0 %v60
    %356 = vmatprep.subr.mxu0 0.0
    %357 = vmatpush1.msra.mxu0 0.0
    %358 = vmatprep.subr.mxu0 0.0
    %359 = vmatpush1.msra.mxu0 0.0
    %360 = vmatprep.subr.mxu0 0.0
    %361 = vmatpush1.msra.mxu0 0.0
    %362 = vmatprep.subr.mxu0 0.0
    %363 = vmatpush1.msra.mxu0 0.0
    %364 = vmatprep.subr.mxu0 0.0
    %365 = vmatpush1.msra.mxu0 0.0
    %366 = vmatprep.subr.mxu0 0.0
    %367 = vmatpush1.msra.mxu0 0.0
    %368 = vmatprep.subr.mxu0 0.0
    %369 = vmatpush1.msra.mxu0 0.0
    %370 = vmatprep.subr.mxu0 0.0
    %371 = vmatpush1.msra.mxu0 0.0
    %372 = vmatprep.subr.mxu0 0.0
    %373 = vmatpush1.msra.mxu0 0.0
    %374 = vmatprep.subr.mxu0 0.0
    %375 = vmatpush1.msra.mxu0 0.0
    %376 = vmatprep.subr.mxu0 0.0
    %377 = vmatpush1.msra.mxu0 0.0
    %378 = vmatprep.subr.mxu0 0.0
    %379 = vmatpush1.msra.mxu0 0.0
    %380 = vmatprep.subr.mxu0 0.0
    %381 = vmatpush1.msra.mxu0 0.0
    %382 = vmatprep.subr.mxu0 0.0
    %383 = vmatpush1.msra.mxu0 0.0
    %384 = vmatprep.subr.mxu0 0.0
    %385 = vmatpush1.msra.mxu0 0.0
    %386 = vmatprep.subr.mxu0 0.0
    %387 = vmatpush1.msra.mxu0 0.0
    %388 = vmatprep.subr.mxu0 0.0
    %389 = vmatpush1.msra.mxu0 0.0
    %390 = vmatprep.subr.mxu0 0.0
    %391 = vmatpush1.msra.mxu0 0.0
    %392 = vmatprep.subr.mxu0 0.0
    %393 = vmatpush1.msra.mxu0 0.0
    %394 = vmatprep.subr.mxu0 0.0
    %395 = vmatpush1.msra.mxu0 0.0
    %396 = vmatprep.subr.mxu0 0.0
    %397 = vmatpush1.msra.mxu0 0.0
    %398 = vmatprep.subr.mxu0 0.0
    %399 = vmatpush1.msra.mxu0 0.0
    %400 = vmatprep.subr.mxu0 0.0
    %401 = vmatpush1.msra.mxu0 0.0
    %402 = vmatprep.subr.mxu0 0.0
    %403 = vmatpush1.msra.mxu0 0.0
    %404 = vmatprep.subr.mxu0 0.0
    %405 = vmatpush1.msra.mxu0 0.0
    %406 = vmatprep.subr.mxu0 0.0
    %407 = vmatpush1.msra.mxu0 0.0
    %408 = vmatprep.subr.mxu0 0.0
    %409 = vmatpush1.msra.mxu0 0.0
    %410 = vmatprep.subr.mxu0 0.0
    %411 = vmatpush1.msra.mxu0 0.0
    %412 = vmatprep.subr.mxu0 0.0
    %413 = vmatpush1.msra.mxu0 0.0
    %414 = vmatprep.subr.mxu0 0.0
    %415 = vmatpush1.msra.mxu0 0.0
    %416 = vmatprep.subr.mxu0 0.0
    %417 = vmatpush1.msra.mxu0 0.0
    %418 = vmatprep.mubr.f32.mxu0 0.0
    %419 = vmatmul.mubr.f32.gmra.mrb[0].mxu0 %v338
    %v420 = vpop.f32.mrb[0].mxu0
    %v421 = vadd.f32 0.0, %v420
    %v422 = vpop.f32.mrb[0].mxu0
    %423 = vmatprep.mubr.f32.mxu0 0.0
    %424 = vmatmul.mubr.f32.gmra.mrb[0].mxu0 %v340
    %v425 = vpop.f32.mrb[0].mxu0
    %v426 = vadd.f32 0.0, %v425
    %v427 = vpop.f32.mrb[0].mxu0
    %428 = vmatprep.mubr.f32.mxu0 0.0
    %429 = vmatmul.mubr.f32.gmra.mrb[0].mxu0 %v342
    %v430 = vpop.f32.mrb[0].mxu0
    %v431 = vadd.f32 0.0, %v430
    %v432 = vpop.f32.mrb[0].mxu0
    %433 = vmatprep.mubr.f32.mxu0 0.0
    %434 = vmatmul.mubr.f32.gmra.mrb[0].mxu0 %v344
    %v435 = vpop.f32.mrb[0].mxu0
    %v436 = vadd.f32 0.0, %v435
    %v437 = vpop.f32.mrb[0].mxu0
    %438 = vmatprep.mubr.f32.mxu0 0.0
    %439 = vmatmul.mubr.f32.gmra.mrb[0].mxu0 %v346
    %v440 = vpop.f32.mrb[0].mxu0
    %v441 = vadd.f32 0.0, %v440
    %v442 = vpop.f32.mrb[0].mxu0
    %443 = vmatprep.mubr.f32.mxu0 0.0
    %444 = vmatmul.mubr.f32.gmra.mrb[0].mxu0 %v348
    %v445 = vpop.f32.mrb[0].mxu0
    %v446 = vadd.f32 0.0, %v445
    %v447 = vpop.f32.mrb[0].mxu0
    %448 = vmatprep.mubr.f32.mxu0 0.0
    %449 = vmatmul.mubr.f32.gmra.mrb[0].mxu0 %v350
    %v450 = vpop.f32.mrb[0].mxu0
    %v451 = vadd.f32 0.0, %v450
    %v452 = vpop.f32.mrb[0].mxu0
    %453 = vmatprep.mubr.f32.mxu0 0.0
    %454 = vmatmul.mubr.f32.gmra.mrb[0].mxu0 %v352
    %v455 = vpop.f32.mrb[0].mxu0
    %v456 = vadd.f32 0.0, %v455
    %v457 = vpop.f32.mrb[0].mxu0
    %458 = vdwg.mxu0
    %v459 = vsel %vm193, %v421, 0.0
    %460 = vadd.xlane.f32.xlu0 %v459
    %v461 = vpop.xlane.xlu0 %460
    %v462 = vsel %vm193, %v426, 0.0
    %463 = vadd.xlane.f32.xlu0 %v462
    %v464 = vpop.xlane.xlu0 %463
    %v465 = vsel %vm193, %v431, 0.0
    %466 = vadd.xlane.f32.xlu0 %v465
    %v467 = vpop.xlane.xlu0 %466
    %v468 = vsel %vm193, %v436, 0.0
    %469 = vadd.xlane.f32.xlu0 %v468
    %v470 = vpop.xlane.xlu0 %469
    %v471 = vsel %vm193, %v441, 0.0
    %472 = vadd.xlane.f32.xlu0 %v471
    %v473 = vpop.xlane.xlu0 %472
    %v474 = vsel %vm193, %v446, 0.0
    %475 = vadd.xlane.f32.xlu0 %v474
    %v476 = vpop.xlane.xlu0 %475
    %v477 = vsel %vm193, %v451, 0.0
    %478 = vadd.xlane.f32.xlu0 %v477
    %v479 = vpop.xlane.xlu0 %478
    %v480 = vsel %vm193, %v456, 0.0
    %481 = vadd.xlane.f32.xlu0 %v480
    %v482 = vpop.xlane.xlu0 %481
    %v483 = vmul.f32 %v461, 0.0625
    %v484 = vmul.f32 %v464, 0.0625
    %v485 = vmul.f32 %v467, 0.0625
    %v486 = vmul.f32 %v470, 0.0625
    %v487 = vmul.f32 %v473, 0.0625
    %v488 = vmul.f32 %v476, 0.0625
    %v489 = vmul.f32 %v479, 0.0625
    %v490 = vmul.f32 %v482, 0.0625
    %v491 = vsub.f32 %v421, %v483
    %v492 = vsub.f32 %v426, %v484
    %v493 = vsub.f32 %v431, %v485
    %v494 = vsub.f32 %v436, %v486
    %v495 = vsub.f32 %v441, %v487
    %v496 = vsub.f32 %v446, %v488
    %v497 = vsub.f32 %v451, %v489
    %v498 = vsub.f32 %v456, %v490
    %v499 = vmul.f32 %v491, %v491
    %v500 = vmul.f32 %v492, %v492
    %v501 = vmul.f32 %v493, %v493
    %v502 = vmul.f32 %v494, %v494
    %v503 = vmul.f32 %v495, %v495
    %v504 = vmul.f32 %v496, %v496
    %v505 = vmul.f32 %v497, %v497
    %v506 = vmul.f32 %v498, %v498
    %v507 = vsel %vm193, %v499, 0.0
    %508 = vadd.xlane.f32.xlu0 %v507
    %v509 = vpop.xlane.xlu0 %508
    %v510 = vsel %vm193, %v500, 0.0
    %511 = vadd.xlane.f32.xlu0 %v510
    %v512 = vpop.xlane.xlu0 %511
    %v513 = vsel %vm193, %v501, 0.0
    %514 = vadd.xlane.f32.xlu0 %v513
    %v515 = vpop.xlane.xlu0 %514
    %v516 = vsel %vm193, %v502, 0.0
    %517 = vadd.xlane.f32.xlu0 %v516
    %v518 = vpop.xlane.xlu0 %517
    %v519 = vsel %vm193, %v503, 0.0
    %520 = vadd.xlane.f32.xlu0 %v519
    %v521 = vpop.xlane.xlu0 %520
    %v522 = vsel %vm193, %v504, 0.0
    %523 = vadd.xlane.f32.xlu0 %v522
    %v524 = vpop.xlane.xlu0 %523
    %v525 = vsel %vm193, %v505, 0.0
    %526 = vadd.xlane.f32.xlu0 %v525
    %v527 = vpop.xlane.xlu0 %526
    %v528 = vsel %vm193, %v506, 0.0
    %529 = vadd.xlane.f32.xlu0 %v528
    %v530 = vpop.xlane.xlu0 %529
    %v531 = vmul.f32 %v509, 0.0625
    %v532 = vmul.f32 %v512, 0.0625
    %v533 = vmul.f32 %v515, 0.0625
    %v534 = vmul.f32 %v518, 0.0625
    %v535 = vmul.f32 %v521, 0.0625
    %v536 = vmul.f32 %v524, 0.0625
    %v537 = vmul.f32 %v527, 0.0625
    %v538 = vmul.f32 %v530, 0.0625
    %v539 = vadd.f32 %v531, 1e-05
    %v540 = vadd.f32 %v532, 1e-05
    %v541 = vadd.f32 %v533, 1e-05
    %v542 = vadd.f32 %v534, 1e-05
    %v543 = vadd.f32 %v535, 1e-05
    %v544 = vadd.f32 %v536, 1e-05
    %v545 = vadd.f32 %v537, 1e-05
    %v546 = vadd.f32 %v538, 1e-05
    %v547 = vrsqrt.pop %v539
    %v548 = vrsqrt.pop %v540
    %v549 = vrsqrt.pop %v541
    %v550 = vrsqrt.pop %v542
    %v551 = vrsqrt.pop %v543
    %v552 = vrsqrt.pop %v544
    %v553 = vrsqrt.pop %v545
    %v554 = vrsqrt.pop %v546
    %v555 = vmul.f32 %v491, %v547
    %v556 = vmul.f32 %v492, %v548
    %v557 = vmul.f32 %v493, %v549
    %v558 = vmul.f32 %v494, %v550
    %v559 = vmul.f32 %v495, %v551
    %v560 = vmul.f32 %v496, %v552
    %v561 = vmul.f32 %v497, %v553
    %v562 = vmul.f32 %v498, %v554
    %v563 = vmul.f32 %v555, %v301
    %v564 = vmul.f32 %v556, %v301
    %v565 = vmul.f32 %v557, %v301
    %v566 = vmul.f32 %v558, %v301
    %v567 = vmul.f32 %v559, %v301
    %v568 = vmul.f32 %v560, %v301
    %v569 = vmul.f32 %v561, %v301
    %v570 = vmul.f32 %v562, %v301
    %v571 = vadd.f32 %v563, %v313
    %v572 = vadd.f32 %v564, %v313
    %v573 = vadd.f32 %v565, %v313
    %v574 = vadd.f32 %v566, %v313
    %v575 = vadd.f32 %v567, %v313
    %v576 = vadd.f32 %v568, %v313
    %v577 = vadd.f32 %v569, %v313
    %v578 = vadd.f32 %v570, %v313
    %579 = vrot.lane.b32.xlu0 %v52, 112
    %v580 = vpop.permute.xlu0 %579
    %581 = vrot.lane.b32.xlu0 %v53, 112
    %v582 = vpop.permute.xlu0 %581
    %583 = vrot.lane.b32.xlu0 %v54, 112
    %v584 = vpop.permute.xlu0 %583
    %585 = vrot.lane.b32.xlu0 %v55, 112
    %v586 = vpop.permute.xlu0 %585
    %587 = vrot.lane.b32.xlu0 %v56, 112
    %v588 = vpop.permute.xlu0 %587
    %589 = vrot.lane.b32.xlu0 %v57, 112
    %v590 = vpop.permute.xlu0 %589
    %591 = vrot.lane.b32.xlu0 %v58, 112
    %v592 = vpop.permute.xlu0 %591
    %593 = vrot.lane.b32.xlu0 %v59, 112
    %v594 = vpop.permute.xlu0 %593
    %v595 = vsel %vm63, %v580, 0
    %v597 = vsel %vm63, %v582, 0
    %v599 = vsel %vm63, %v584, 0
    %v601 = vsel %vm63, %v586, 0
    %v603 = vsel %vm63, %v588, 0
    %v605 = vsel %vm63, %v590, 0
    %v607 = vsel %vm63, %v592, 0
    %v609 = vsel %vm63, %v594, 0
    %611 = vmatprep.subr.mxu0 0.0
    %612 = vmatpush1.msra.mxu0 %v60
    %613 = vmatprep.subr.mxu0 0.0
    %614 = vmatpush1.msra.mxu0 0.0
    %615 = vmatprep.subr.mxu0 0.0
    %616 = vmatpush1.msra.mxu0 0.0
    %617 = vmatprep.subr.mxu0 0.0
    %618 = vmatpush1.msra.mxu0 0.0
    %619 = vmatprep.subr.mxu0 0.0
    %620 = vmatpush1.msra.mxu0 0.0
    %621 = vmatprep.subr.mxu0 0.0
    %622 = vmatpush1.msra.mxu0 0.0
    %623 = vmatprep.subr.mxu0 0.0
    %624 = vmatpush1.msra.mxu0 0.0
    %625 = vmatprep.subr.mxu0 0.0
    %626 = vmatpush1.msra.mxu0 0.0
    %627 = vmatprep.subr.mxu0 0.0
    %628 = vmatpush1.msra.mxu0 0.0
    %629 = vmatprep.subr.mxu0 0.0
    %630 = vmatpush1.msra.mxu0 0.0
    %631 = vmatprep.subr.mxu0 0.0
    %632 = vmatpush1.msra.mxu0 0.0
    %633 = vmatprep.subr.mxu0 0.0
    %634 = vmatpush1.msra.mxu0 0.0
    %635 = vmatprep.subr.mxu0 0.0
    %636 = vmatpush1.msra.mxu0 0.0
    %637 = vmatprep.subr.mxu0 0.0
    %638 = vmatpush1.msra.mxu0 0.0
    %639 = vmatprep.subr.mxu0 0.0
    %640 = vmatpush1.msra.mxu0 0.0
    %641 = vmatprep.subr.mxu0 0.0
    %642 = vmatpush1.msra.mxu0 0.0
    %643 = vmatprep.subr.mxu0 0.0
    %644 = vmatpush1.msra.mxu0 0.0
    %645 = vmatprep.subr.mxu0 0.0
    %646 = vmatpush1.msra.mxu0 0.0
    %647 = vmatprep.subr.mxu0 0.0
    %648 = vmatpush1.msra.mxu0 0.0
    %649 = vmatprep.subr.mxu0 0.0
    %650 = vmatpush1.msra.mxu0 0.0
    %651 = vmatprep.subr.mxu0 0.0
    %652 = vmatpush1.msra.mxu0 0.0
    %653 = vmatprep.subr.mxu0 0.0
    %654 = vmatpush1.msra.mxu0 0.0
    %655 = vmatprep.subr.mxu0 0.0
    %656 = vmatpush1.msra.mxu0 0.0
    %657 = vmatprep.subr.mxu0 0.0
    %658 = vmatpush1.msra.mxu0 0.0
    %659 = vmatprep.subr.mxu0 0.0
    %660 = vmatpush1.msra.mxu0 0.0
    %661 = vmatprep.subr.mxu0 0.0
    %662 = vmatpush1.msra.mxu0 0.0
    %663 = vmatprep.subr.mxu0 0.0
    %664 = vmatpush1.msra.mxu0 0.0
    %665 = vmatprep.subr.mxu0 0.0
    %666 = vmatpush1.msra.mxu0 0.0
    %667 = vmatprep.subr.mxu0 0.0
    %668 = vmatpush1.msra.mxu0 0.0
    %669 = vmatprep.subr.mxu0 0.0
    %670 = vmatpush1.msra.mxu0 0.0
    %671 = vmatprep.subr.mxu0 0.0
    %672 = vmatpush1.msra.mxu0 0.0
    %673 = vmatprep.subr.mxu0 0.0
    %674 = vmatpush1.msra.mxu0 0.0
    %675 = vmatprep.mubr.f32.mxu0 0.0
    %676 = vmatmul.mubr.f32.gmra.mrb[0].mxu0 %v595
    %v677 = vpop.f32.mrb[0].mxu0
    %v678 = vadd.f32 0.0, %v677
    %v679 = vpop.f32.mrb[0].mxu0
    %680 = vmatprep.mubr.f32.mxu0 0.0
    %681 = vmatmul.mubr.f32.gmra.mrb[0].mxu0 %v597
    %v682 = vpop.f32.mrb[0].mxu0
    %v683 = vadd.f32 0.0, %v682
    %v684 = vpop.f32.mrb[0].mxu0
    %685 = vmatprep.mubr.f32.mxu0 0.0
    %686 = vmatmul.mubr.f32.gmra.mrb[0].mxu0 %v599
    %v687 = vpop.f32.mrb[0].mxu0
    %v688 = vadd.f32 0.0, %v687
    %v689 = vpop.f32.mrb[0].mxu0
    %690 = vmatprep.mubr.f32.mxu0 0.0
    %691 = vmatmul.mubr.f32.gmra.mrb[0].mxu0 %v601
    %v692 = vpop.f32.mrb[0].mxu0
    %v693 = vadd.f32 0.0, %v692
    %v694 = vpop.f32.mrb[0].mxu0
    %695 = vmatprep.mubr.f32.mxu0 0.0
    %696 = vmatmul.mubr.f32.gmra.mrb[0].mxu0 %v603
    %v697 = vpop.f32.mrb[0].mxu0
    %v698 = vadd.f32 0.0, %v697
    %v699 = vpop.f32.mrb[0].mxu0
    %700 = vmatprep.mubr.f32.mxu0 0.0
    %701 = vmatmul.mubr.f32.gmra.mrb[0].mxu0 %v605
    %v702 = vpop.f32.mrb[0].mxu0
    %v703 = vadd.f32 0.0, %v702
    %v704 = vpop.f32.mrb[0].mxu0
    %705 = vmatprep.mubr.f32.mxu0 0.0
    %706 = vmatmul.mubr.f32.gmra.mrb[0].mxu0 %v607
    %v707 = vpop.f32.mrb[0].mxu0
    %v708 = vadd.f32 0.0, %v707
    %v709 = vpop.f32.mrb[0].mxu0
    %710 = vmatprep.mubr.f32.mxu0 0.0
    %711 = vmatmul.mubr.f32.gmra.mrb[0].mxu0 %v609
    %v712 = vpop.f32.mrb[0].mxu0
    %v713 = vadd.f32 0.0, %v712
    %v714 = vpop.f32.mrb[0].mxu0
    %715 = vdwg.mxu0
    %v716 = vsel %vm193, %v678, 0.0
    %717 = vadd.xlane.f32.xlu0 %v716
    %v718 = vpop.xlane.xlu0 %717
    %v719 = vsel %vm193, %v683, 0.0
    %720 = vadd.xlane.f32.xlu0 %v719
    %v721 = vpop.xlane.xlu0 %720
    %v722 = vsel %vm193, %v688, 0.0
    %723 = vadd.xlane.f32.xlu0 %v722
    %v724 = vpop.xlane.xlu0 %723
    %v725 = vsel %vm193, %v693, 0.0
    %726 = vadd.xlane.f32.xlu0 %v725
    %v727 = vpop.xlane.xlu0 %726
    %v728 = vsel %vm193, %v698, 0.0
    %729 = vadd.xlane.f32.xlu0 %v728
    %v730 = vpop.xlane.xlu0 %729
    %v731 = vsel %vm193, %v703, 0.0
    %732 = vadd.xlane.f32.xlu0 %v731
    %v733 = vpop.xlane.xlu0 %732
    %v734 = vsel %vm193, %v708, 0.0
    %735 = vadd.xlane.f32.xlu0 %v734
    %v736 = vpop.xlane.xlu0 %735
    %v737 = vsel %vm193, %v713, 0.0
    %738 = vadd.xlane.f32.xlu0 %v737
    %v739 = vpop.xlane.xlu0 %738
    %v740 = vmul.f32 %v718, 0.0625
    %v741 = vmul.f32 %v721, 0.0625
    %v742 = vmul.f32 %v724, 0.0625
    %v743 = vmul.f32 %v727, 0.0625
    %v744 = vmul.f32 %v730, 0.0625
    %v745 = vmul.f32 %v733, 0.0625
    %v746 = vmul.f32 %v736, 0.0625
    %v747 = vmul.f32 %v739, 0.0625
    %v748 = vsub.f32 %v678, %v740
    %v749 = vsub.f32 %v683, %v741
    %v750 = vsub.f32 %v688, %v742
    %v751 = vsub.f32 %v693, %v743
    %v752 = vsub.f32 %v698, %v744
    %v753 = vsub.f32 %v703, %v745
    %v754 = vsub.f32 %v708, %v746
    %v755 = vsub.f32 %v713, %v747
    %v756 = vmul.f32 %v748, %v748
    %v757 = vmul.f32 %v749, %v749
    %v758 = vmul.f32 %v750, %v750
    %v759 = vmul.f32 %v751, %v751
    %v760 = vmul.f32 %v752, %v752
    %v761 = vmul.f32 %v753, %v753
    %v762 = vmul.f32 %v754, %v754
    %v763 = vmul.f32 %v755, %v755
    %v764 = vsel %vm193, %v756, 0.0
    %765 = vadd.xlane.f32.xlu0 %v764
    %v766 = vpop.xlane.xlu0 %765
    %v767 = vsel %vm193, %v757, 0.0
    %768 = vadd.xlane.f32.xlu0 %v767
    %v769 = vpop.xlane.xlu0 %768
    %v770 = vsel %vm193, %v758, 0.0
    %771 = vadd.xlane.f32.xlu0 %v770
    %v772 = vpop.xlane.xlu0 %771
    %v773 = vsel %vm193, %v759, 0.0
    %774 = vadd.xlane.f32.xlu0 %v773
    %v775 = vpop.xlane.xlu0 %774
    %v776 = vsel %vm193, %v760, 0.0
    %777 = vadd.xlane.f32.xlu0 %v776
    %v778 = vpop.xlane.xlu0 %777
    %v779 = vsel %vm193, %v761, 0.0
    %780 = vadd.xlane.f32.xlu0 %v779
    %v781 = vpop.xlane.xlu0 %780
    %v782 = vsel %vm193, %v762, 0.0
    %783 = vadd.xlane.f32.xlu0 %v782
    %v784 = vpop.xlane.xlu0 %783
    %v785 = vsel %vm193, %v763, 0.0
    %786 = vadd.xlane.f32.xlu0 %v785
    %v787 = vpop.xlane.xlu0 %786
    %v788 = vmul.f32 %v766, 0.0625
    %v789 = vmul.f32 %v769, 0.0625
    %v790 = vmul.f32 %v772, 0.0625
    %v791 = vmul.f32 %v775, 0.0625
    %v792 = vmul.f32 %v778, 0.0625
    %v793 = vmul.f32 %v781, 0.0625
    %v794 = vmul.f32 %v784, 0.0625
    %v795 = vmul.f32 %v787, 0.0625
    %v796 = vadd.f32 %v788, 1e-05
    %v797 = vadd.f32 %v789, 1e-05
    %v798 = vadd.f32 %v790, 1e-05
    %v799 = vadd.f32 %v791, 1e-05
    %v800 = vadd.f32 %v792, 1e-05
    %v801 = vadd.f32 %v793, 1e-05
    %v802 = vadd.f32 %v794, 1e-05
    %v803 = vadd.f32 %v795, 1e-05
    %v804 = vrsqrt.pop %v796
    %v805 = vrsqrt.pop %v797
    %v806 = vrsqrt.pop %v798
    %v807 = vrsqrt.pop %v799
    %v808 = vrsqrt.pop %v800
    %v809 = vrsqrt.pop %v801
    %v810 = vrsqrt.pop %v802
    %v811 = vrsqrt.pop %v803
    %v812 = vmul.f32 %v748, %v804
    %v813 = vmul.f32 %v749, %v805
    %v814 = vmul.f32 %v750, %v806
    %v815 = vmul.f32 %v751, %v807
    %v816 = vmul.f32 %v752, %v808
    %v817 = vmul.f32 %v753, %v809
    %v818 = vmul.f32 %v754, %v810
    %v819 = vmul.f32 %v755, %v811
    %v820 = vmul.f32 %v812, %v301
    %v821 = vmul.f32 %v813, %v301
    %v822 = vmul.f32 %v814, %v301
    %v823 = vmul.f32 %v815, %v301
    %v824 = vmul.f32 %v816, %v301
    %v825 = vmul.f32 %v817, %v301
    %v826 = vmul.f32 %v818, %v301
    %v827 = vmul.f32 %v819, %v301
    %v828 = vadd.f32 %v820, %v313
    %v829 = vadd.f32 %v821, %v313
    %v830 = vadd.f32 %v822, %v313
    %v831 = vadd.f32 %v823, %v313
    %v832 = vadd.f32 %v824, %v313
    %v833 = vadd.f32 %v825, %v313
    %v834 = vadd.f32 %v826, %v313
    %v835 = vadd.f32 %v827, %v313
    %836 = vrot.lane.b32.xlu0 %v52, 104
    %v837 = vpop.permute.xlu0 %836
    %838 = vrot.lane.b32.xlu0 %v53, 104
    %v839 = vpop.permute.xlu0 %838
    %840 = vrot.lane.b32.xlu0 %v54, 104
    %v841 = vpop.permute.xlu0 %840
    %842 = vrot.lane.b32.xlu0 %v55, 104
    %v843 = vpop.permute.xlu0 %842
    %844 = vrot.lane.b32.xlu0 %v56, 104
    %v845 = vpop.permute.xlu0 %844
    %846 = vrot.lane.b32.xlu0 %v57, 104
    %v847 = vpop.permute.xlu0 %846
    %848 = vrot.lane.b32.xlu0 %v58, 104
    %v849 = vpop.permute.xlu0 %848
    %850 = vrot.lane.b32.xlu0 %v59, 104
    %v851 = vpop.permute.xlu0 %850
    %v852 = vsel %vm63, %v837, 0
    %v854 = vsel %vm63, %v839, 0
    %v856 = vsel %vm63, %v841, 0
    %v858 = vsel %vm63, %v843, 0
    %v860 = vsel %vm63, %v845, 0
    %v862 = vsel %vm63, %v847, 0
    %v864 = vsel %vm63, %v849, 0
    %v866 = vsel %vm63, %v851, 0
    %868 = vmatprep.subr.mxu0 0.0
    %869 = vmatpush1.msra.mxu0 %v60
    %870 = vmatprep.subr.mxu0 0.0
    %871 = vmatpush1.msra.mxu0 0.0
    %872 = vmatprep.subr.mxu0 0.0
    %873 = vmatpush1.msra.mxu0 0.0
    %874 = vmatprep.subr.mxu0 0.0
    %875 = vmatpush1.msra.mxu0 0.0
    %876 = vmatprep.subr.mxu0 0.0
    %877 = vmatpush1.msra.mxu0 0.0
    %878 = vmatprep.subr.mxu0 0.0
    %879 = vmatpush1.msra.mxu0 0.0
    %880 = vmatprep.subr.mxu0 0.0
    %881 = vmatpush1.msra.mxu0 0.0
    %882 = vmatprep.subr.mxu0 0.0
    %883 = vmatpush1.msra.mxu0 0.0
    %884 = vmatprep.subr.mxu0 0.0
    %885 = vmatpush1.msra.mxu0 0.0
    %886 = vmatprep.subr.mxu0 0.0
    %887 = vmatpush1.msra.mxu0 0.0
    %888 = vmatprep.subr.mxu0 0.0
    %889 = vmatpush1.msra.mxu0 0.0
    %890 = vmatprep.subr.mxu0 0.0
    %891 = vmatpush1.msra.mxu0 0.0
    %892 = vmatprep.subr.mxu0 0.0
    %893 = vmatpush1.msra.mxu0 0.0
    %894 = vmatprep.subr.mxu0 0.0
    %895 = vmatpush1.msra.mxu0 0.0
    %896 = vmatprep.subr.mxu0 0.0
    %897 = vmatpush1.msra.mxu0 0.0
    %898 = vmatprep.subr.mxu0 0.0
    %899 = vmatpush1.msra.mxu0 0.0
    %900 = vmatprep.subr.mxu0 0.0
    %901 = vmatpush1.msra.mxu0 0.0
    %902 = vmatprep.subr.mxu0 0.0
    %903 = vmatpush1.msra.mxu0 0.0
    %904 = vmatprep.subr.mxu0 0.0
    %905 = vmatpush1.msra.mxu0 0.0
    %906 = vmatprep.subr.mxu0 0.0
    %907 = vmatpush1.msra.mxu0 0.0
    %908 = vmatprep.subr.mxu0 0.0
    %909 = vmatpush1.msra.mxu0 0.0
    %910 = vmatprep.subr.mxu0 0.0
    %911 = vmatpush1.msra.mxu0 0.0
    %912 = vmatprep.subr.mxu0 0.0
    %913 = vmatpush1.msra.mxu0 0.0
    %914 = vmatprep.subr.mxu0 0.0
    %915 = vmatpush1.msra.mxu0 0.0
    %916 = vmatprep.subr.mxu0 0.0
    %917 = vmatpush1.msra.mxu0 0.0
    %918 = vmatprep.subr.mxu0 0.0
    %919 = vmatpush1.msra.mxu0 0.0
    %920 = vmatprep.subr.mxu0 0.0
    %921 = vmatpush1.msra.mxu0 0.0
    %922 = vmatprep.subr.mxu0 0.0
    %923 = vmatpush1.msra.mxu0 0.0
    %924 = vmatprep.subr.mxu0 0.0
    %925 = vmatpush1.msra.mxu0 0.0
    %926 = vmatprep.subr.mxu0 0.0
    %927 = vmatpush1.msra.mxu0 0.0
    %928 = vmatprep.subr.mxu0 0.0
    %929 = vmatpush1.msra.mxu0 0.0
    %930 = vmatprep.subr.mxu0 0.0
    %931 = vmatpush1.msra.mxu0 0.0
    %932 = vmatprep.mubr.f32.mxu0 0.0
    %933 = vmatmul.mubr.f32.gmra.mrb[0].mxu0 %v852
    %v934 = vpop.f32.mrb[0].mxu0
    %v935 = vadd.f32 0.0, %v934
    %v936 = vpop.f32.mrb[0].mxu0
    %937 = vmatprep.mubr.f32.mxu0 0.0
    %938 = vmatmul.mubr.f32.gmra.mrb[0].mxu0 %v854
    %v939 = vpop.f32.mrb[0].mxu0
    %v940 = vadd.f32 0.0, %v939
    %v941 = vpop.f32.mrb[0].mxu0
    %942 = vmatprep.mubr.f32.mxu0 0.0
    %943 = vmatmul.mubr.f32.gmra.mrb[0].mxu0 %v856
    %v944 = vpop.f32.mrb[0].mxu0
    %v945 = vadd.f32 0.0, %v944
    %v946 = vpop.f32.mrb[0].mxu0
    %947 = vmatprep.mubr.f32.mxu0 0.0
    %948 = vmatmul.mubr.f32.gmra.mrb[0].mxu0 %v858
    %v949 = vpop.f32.mrb[0].mxu0
    %v950 = vadd.f32 0.0, %v949
    %v951 = vpop.f32.mrb[0].mxu0
    %952 = vmatprep.mubr.f32.mxu0 0.0
    %953 = vmatmul.mubr.f32.gmra.mrb[0].mxu0 %v860
    %v954 = vpop.f32.mrb[0].mxu0
    %v955 = vadd.f32 0.0, %v954
    %v956 = vpop.f32.mrb[0].mxu0
    %957 = vmatprep.mubr.f32.mxu0 0.0
    %958 = vmatmul.mubr.f32.gmra.mrb[0].mxu0 %v862
    %v959 = vpop.f32.mrb[0].mxu0
    %v960 = vadd.f32 0.0, %v959
    %v961 = vpop.f32.mrb[0].mxu0
    %962 = vmatprep.mubr.f32.mxu0 0.0
    %963 = vmatmul.mubr.f32.gmra.mrb[0].mxu0 %v864
    %v964 = vpop.f32.mrb[0].mxu0
    %v965 = vadd.f32 0.0, %v964
    %v966 = vpop.f32.mrb[0].mxu0
    %967 = vmatprep.mubr.f32.mxu0 0.0
    %968 = vmatmul.mubr.f32.gmra.mrb[0].mxu0 %v866
    %v969 = vpop.f32.mrb[0].mxu0
    %v970 = vadd.f32 0.0, %v969
    %v971 = vpop.f32.mrb[0].mxu0
    %972 = vdwg.mxu0
    %v973 = vsel %vm193, %v935, 0.0
    %974 = vadd.xlane.f32.xlu0 %v973
    %v975 = vpop.xlane.xlu0 %974
    %v976 = vsel %vm193, %v940, 0.0
    %977 = vadd.xlane.f32.xlu0 %v976
    %v978 = vpop.xlane.xlu0 %977
    %v979 = vsel %vm193, %v945, 0.0
    %980 = vadd.xlane.f32.xlu0 %v979
    %v981 = vpop.xlane.xlu0 %980
    %v982 = vsel %vm193, %v950, 0.0
    %983 = vadd.xlane.f32.xlu0 %v982
    %v984 = vpop.xlane.xlu0 %983
    %v985 = vsel %vm193, %v955, 0.0
    %986 = vadd.xlane.f32.xlu0 %v985
    %v987 = vpop.xlane.xlu0 %986
    %v988 = vsel %vm193, %v960, 0.0
    %989 = vadd.xlane.f32.xlu0 %v988
    %v990 = vpop.xlane.xlu0 %989
    %v991 = vsel %vm193, %v965, 0.0
    %992 = vadd.xlane.f32.xlu0 %v991
    %v993 = vpop.xlane.xlu0 %992
    %v994 = vsel %vm193, %v970, 0.0
    %995 = vadd.xlane.f32.xlu0 %v994
    %v996 = vpop.xlane.xlu0 %995
    %v997 = vmul.f32 %v975, 0.0625
    %v998 = vmul.f32 %v978, 0.0625
    %v999 = vmul.f32 %v981, 0.0625
    %v1000 = vmul.f32 %v984, 0.0625
    %v1001 = vmul.f32 %v987, 0.0625
    %v1002 = vmul.f32 %v990, 0.0625
    %v1003 = vmul.f32 %v993, 0.0625
    %v1004 = vmul.f32 %v996, 0.0625
    %v1005 = vsub.f32 %v935, %v997
    %v1006 = vsub.f32 %v940, %v998
    %v1007 = vsub.f32 %v945, %v999
    %v1008 = vsub.f32 %v950, %v1000
    %v1009 = vsub.f32 %v955, %v1001
    %v1010 = vsub.f32 %v960, %v1002
    %v1011 = vsub.f32 %v965, %v1003
    %v1012 = vsub.f32 %v970, %v1004
    %v1013 = vmul.f32 %v1005, %v1005
    %v1014 = vmul.f32 %v1006, %v1006
    %v1015 = vmul.f32 %v1007, %v1007
    %v1016 = vmul.f32 %v1008, %v1008
    %v1017 = vmul.f32 %v1009, %v1009
    %v1018 = vmul.f32 %v1010, %v1010
    %v1019 = vmul.f32 %v1011, %v1011
    %v1020 = vmul.f32 %v1012, %v1012
    %v1021 = vsel %vm193, %v1013, 0.0
    %1022 = vadd.xlane.f32.xlu0 %v1021
    %v1023 = vpop.xlane.xlu0 %1022
    %v1024 = vsel %vm193, %v1014, 0.0
    %1025 = vadd.xlane.f32.xlu0 %v1024
    %v1026 = vpop.xlane.xlu0 %1025
    %v1027 = vsel %vm193, %v1015, 0.0
    %1028 = vadd.xlane.f32.xlu0 %v1027
    %v1029 = vpop.xlane.xlu0 %1028
    %v1030 = vsel %vm193, %v1016, 0.0
    %1031 = vadd.xlane.f32.xlu0 %v1030
    %v1032 = vpop.xlane.xlu0 %1031
    %v1033 = vsel %vm193, %v1017, 0.0
    %1034 = vadd.xlane.f32.xlu0 %v1033
    %v1035 = vpop.xlane.xlu0 %1034
    %v1036 = vsel %vm193, %v1018, 0.0
    %1037 = vadd.xlane.f32.xlu0 %v1036
    %v1038 = vpop.xlane.xlu0 %1037
    %v1039 = vsel %vm193, %v1019, 0.0
    %1040 = vadd.xlane.f32.xlu0 %v1039
    %v1041 = vpop.xlane.xlu0 %1040
    %v1042 = vsel %vm193, %v1020, 0.0
    %1043 = vadd.xlane.f32.xlu0 %v1042
    %v1044 = vpop.xlane.xlu0 %1043
    %v1045 = vmul.f32 %v1023, 0.0625
    %v1046 = vmul.f32 %v1026, 0.0625
    %v1047 = vmul.f32 %v1029, 0.0625
    %v1048 = vmul.f32 %v1032, 0.0625
    %v1049 = vmul.f32 %v1035, 0.0625
    %v1050 = vmul.f32 %v1038, 0.0625
    %v1051 = vmul.f32 %v1041, 0.0625
    %v1052 = vmul.f32 %v1044, 0.0625
    %v1053 = vadd.f32 %v1045, 1e-05
    %v1054 = vadd.f32 %v1046, 1e-05
    %v1055 = vadd.f32 %v1047, 1e-05
    %v1056 = vadd.f32 %v1048, 1e-05
    %v1057 = vadd.f32 %v1049, 1e-05
    %v1058 = vadd.f32 %v1050, 1e-05
    %v1059 = vadd.f32 %v1051, 1e-05
    %v1060 = vadd.f32 %v1052, 1e-05
    %v1061 = vrsqrt.pop %v1053
    %v1062 = vrsqrt.pop %v1054
    %v1063 = vrsqrt.pop %v1055
    %v1064 = vrsqrt.pop %v1056
    %v1065 = vrsqrt.pop %v1057
    %v1066 = vrsqrt.pop %v1058
    %v1067 = vrsqrt.pop %v1059
    %v1068 = vrsqrt.pop %v1060
    %v1069 = vmul.f32 %v1005, %v1061
    %v1070 = vmul.f32 %v1006, %v1062
    %v1071 = vmul.f32 %v1007, %v1063
    %v1072 = vmul.f32 %v1008, %v1064
    %v1073 = vmul.f32 %v1009, %v1065
    %v1074 = vmul.f32 %v1010, %v1066
    %v1075 = vmul.f32 %v1011, %v1067
    %v1076 = vmul.f32 %v1012, %v1068
    %v1077 = vmul.f32 %v1069, %v301
    %v1078 = vmul.f32 %v1070, %v301
    %v1079 = vmul.f32 %v1071, %v301
    %v1080 = vmul.f32 %v1072, %v301
    %v1081 = vmul.f32 %v1073, %v301
    %v1082 = vmul.f32 %v1074, %v301
    %v1083 = vmul.f32 %v1075, %v301
    %v1084 = vmul.f32 %v1076, %v301
    %v1085 = vadd.f32 %v1077, %v313
    %v1086 = vadd.f32 %v1078, %v313
    %v1087 = vadd.f32 %v1079, %v313
    %v1088 = vadd.f32 %v1080, %v313
    %v1089 = vadd.f32 %v1081, %v313
    %v1090 = vadd.f32 %v1082, %v313
    %v1091 = vadd.f32 %v1083, %v313
    %v1092 = vadd.f32 %v1084, %v313
    %1101 = vrot.lane.b32.xlu0 %v828, 16
    %v1102 = vpop.permute.xlu0 %1101
    %1103 = vrot.lane.b32.xlu0 %v829, 16
    %v1104 = vpop.permute.xlu0 %1103
    %1105 = vrot.lane.b32.xlu0 %v830, 16
    %v1106 = vpop.permute.xlu0 %1105
    %1107 = vrot.lane.b32.xlu0 %v831, 16
    %v1108 = vpop.permute.xlu0 %1107
    %1109 = vrot.lane.b32.xlu0 %v832, 16
    %v1110 = vpop.permute.xlu0 %1109
    %1111 = vrot.lane.b32.xlu0 %v833, 16
    %v1112 = vpop.permute.xlu0 %1111
    %1113 = vrot.lane.b32.xlu0 %v834, 16
    %v1114 = vpop.permute.xlu0 %1113
    %1115 = vrot.lane.b32.xlu0 %v835, 16
    %v1116 = vpop.permute.xlu0 %1115
    %v1125 = vsel %vm193, %v314, %v1102
    %v1126 = vsel %vm193, %v315, %v1104
    %v1127 = vsel %vm193, %v316, %v1106
    %v1128 = vsel %vm193, %v317, %v1108
    %v1129 = vsel %vm193, %v318, %v1110
    %v1130 = vsel %vm193, %v319, %v1112
    %v1131 = vsel %vm193, %v320, %v1114
    %v1132 = vsel %vm193, %v321, %v1116
    %1141 = vrot.lane.b32.xlu0 %v1085, 16
    %v1142 = vpop.permute.xlu0 %1141
    %1143 = vrot.lane.b32.xlu0 %v1086, 16
    %v1144 = vpop.permute.xlu0 %1143
    %1145 = vrot.lane.b32.xlu0 %v1087, 16
    %v1146 = vpop.permute.xlu0 %1145
    %1147 = vrot.lane.b32.xlu0 %v1088, 16
    %v1148 = vpop.permute.xlu0 %1147
    %1149 = vrot.lane.b32.xlu0 %v1089, 16
    %v1150 = vpop.permute.xlu0 %1149
    %1151 = vrot.lane.b32.xlu0 %v1090, 16
    %v1152 = vpop.permute.xlu0 %1151
    %1153 = vrot.lane.b32.xlu0 %v1091, 16
    %v1154 = vpop.permute.xlu0 %1153
    %1155 = vrot.lane.b32.xlu0 %v1092, 16
    %v1156 = vpop.permute.xlu0 %1155
    %v1165 = vsel %vm193, %v571, %v1142
    %v1166 = vsel %vm193, %v572, %v1144
    %v1167 = vsel %vm193, %v573, %v1146
    %v1168 = vsel %vm193, %v574, %v1148
    %v1169 = vsel %vm193, %v575, %v1150
    %v1170 = vsel %vm193, %v576, %v1152
    %v1171 = vsel %vm193, %v577, %v1154
    %v1172 = vsel %vm193, %v578, %v1156
    %vm1173 = vcmask 261120
    %1174 = vst.msk [vmem:[#allocation8] sm:$0xff] %vm1173, %v1125
    %1175 = vst.msk [vmem:[#allocation8 + $0x10] sm:$0xff] %vm1173, %v1126
    %1176 = vst.msk [vmem:[#allocation8 + $0x20] sm:$0xff] %vm1173, %v1127
    %1177 = vst.msk [vmem:[#allocation8 + $0x30] sm:$0xff] %vm1173, %v1128
    %1178 = vst.msk [vmem:[#allocation8 + $0x40] sm:$0xff] %vm1173, %v1129
    %1179 = vst.msk [vmem:[#allocation8 + $0x50] sm:$0xff] %vm1173, %v1130
    %1180 = vst.msk [vmem:[#allocation8 + $0x60] sm:$0xff] %vm1173, %v1131
    %1181 = vst.msk [vmem:[#allocation8 + $0x70] sm:$0xff] %vm1173, %v1132
    %s1182 = scalar_lea.vmem [#allocation8], 8
    %1183 = vst.msk [vmem:[%s1182] sm:$0xff] %vm1173, %v1165
    %1184 = vst.msk [vmem:[%s1182 + $0x10] sm:$0xff] %vm1173, %v1166
    %1185 = vst.msk [vmem:[%s1182 + $0x20] sm:$0xff] %vm1173, %v1167
    %1186 = vst.msk [vmem:[%s1182 + $0x30] sm:$0xff] %vm1173, %v1168
    %1187 = vst.msk [vmem:[%s1182 + $0x40] sm:$0xff] %vm1173, %v1169
    %1188 = vst.msk [vmem:[%s1182 + $0x50] sm:$0xff] %vm1173, %v1170
    %1189 = vst.msk [vmem:[%s1182 + $0x60] sm:$0xff] %vm1173, %v1171
    %1190 = vst.msk [vmem:[%s1182 + $0x70] sm:$0xff] %vm1173, %v1172
    // Predicated region
    $region26: #{patch_split.1} parent=1 // pred_check
      _
    $region27: #{patch_split.1} parent=1 // pred_check_branch
      %1192 = sbr.rel (0) target = $region29
    $region28: #{patch_split.1} parent=1 // pred_region
      %s1194 = ssub.s32 2048, 2048
      %1195 = vsyncadd [#allocation4], %s1194
      %s1196 = sshll.u32 [#allocation8], 4
      %s1197 = int_to_ptr.vmem [resolvable:$true] %s1196
      %1202 = dma.vmem_to_hbm [thread:$0]  %s1197, 2048, %s3, [#allocation4], 128, 128, 8
    $region29: #{patch_split.1} parent=1 // pred_fallthru
      _
    // Predicated region
    $region30: #{patch_split.1} parent=1 // pred_check
      _
    $region31: #{patch_split.1} parent=1 // pred_check_branch
      %1204 = sbr.rel (0) target = $region33
    $region32: #{patch_split.1} parent=1 // pred_region
      %1205 = dma.done [#allocation4], 2048
    $region33: #{patch_split.1} parent=1 // pred_fallthru
      _
    %1206 = vsyncpa [#allocation3], 1
    %1207 = vsyncpa [#allocation6], 1
    %1208 = vsyncpa [#allocation4], 1

</llo_original>
